<compile_context>
chip_gen: v7x
topology: tpu7x:2x2x1
jax: 0.10.0
libtpu: 0.0.40
codegen_flags: <defaults>
</compile_context>

<pallas_src>
import functools

import jax
import jax.numpy as jnp
from jax.experimental import pallas as pl
from jax.experimental.pallas import tpu as pltpu


# ---------------------------------------------------------------------------
# Kernel
# ---------------------------------------------------------------------------
def _varifocal_kernel(pred_ref, target_ref, out_ref, *, alpha, gamma,
                      iou_weighted):
    x = pred_ref[...].astype(jnp.float32)        # logits
    t = target_ref[...].astype(jnp.float32)      # iou-aware targets

    # Shared transcendentals (3 EUP ops total per element):
    #   e  = exp(-|x|)
    #   lp = log1p(e)            -> used directly by the stable BCE
    #   inv = exp(-lp) = 1/(1+e) -> full-precision sigmoid without a divide
    e = jnp.exp(-jnp.abs(x))
    lp = jnp.log1p(e)
    inv = jnp.exp(-lp)
    pred_sigmoid = jnp.where(x >= 0.0, inv, e * inv)

    diff = pred_sigmoid - t
    if gamma == 2.0:                             # default path: no pow()
        mod = diff * diff
    else:
        mod = jnp.power(jnp.abs(diff), gamma)
    neg_term = alpha * mod

    # focal_weight = where(t > 0, t [or 1], alpha * |sigmoid - t|^gamma)
    if iou_weighted:
        focal_weight = jnp.where(t > 0.0, t, neg_term)
    else:
        focal_weight = jnp.where(t > 0.0, 1.0, neg_term)

    # Numerically-stable binary_cross_entropy_with_logits (reduction='none'):
    #   bce = max(x, 0) - x*t + log1p(exp(-|x|))
    bce = jnp.maximum(x, 0.0) - x * t + lp

    out_ref[...] = (bce * focal_weight).astype(out_ref.dtype)


# ---------------------------------------------------------------------------
# Wrapper: layout selection, tiling, pallas_call
# ---------------------------------------------------------------------------
def _round_up(x, m):
    return ((x + m - 1) // m) * m


def _sublane_multiple(dtype):
    # Minimum row multiple for the (sublane, lane) tiling: 8 for 4-byte,
    # 16 for 2-byte, 32 for 1-byte dtypes.
    return max(8, 32 // jnp.dtype(dtype).itemsize)


def varifocal_loss(pred, target, alpha=0.75, gamma=2.0, iou_weighted=True,
                   target_block_bytes=2 << 20):
    """Elementwise varifocal loss, reduction='none'. pred/target: (N, C)."""
    assert pred.shape == target.shape
    orig_shape = pred.shape
    dtype = pred.dtype
    target = target.astype(dtype)                # target.type_as(pred)
    itemsize = jnp.dtype(dtype).itemsize
    sub_m = _sublane_multiple(dtype)

    total = 1
    for d in orig_shape:
        total *= int(d)

    # --- lane-dense flattening -------------------------------------------
    lanes = None
    for cand in (1024, 512, 256, 128):
        if total % cand == 0:
            lanes = cand
            break

    if lanes is not None:
        rows = total // lanes
        x2 = pred.reshape(rows, lanes)
        t2 = target.reshape(rows, lanes)
    else:
        # Fallback: keep a (rows, C) layout with the trailing dim as lanes.
        # TODO(synk): an optional pad-to-128 path would make these stores
        # fully lane-dense at the cost of one extra HBM copy.
        if pred.ndim < 2:
            x2 = pred.reshape(1, -1)
            t2 = target.reshape(1, -1)
        else:
            x2 = pred.reshape(-1, orig_shape[-1])
            t2 = target.reshape(-1, orig_shape[-1])
        rows, lanes = x2.shape

    # --- row tiling --------------------------------------------------------
    # Target ~target_block_bytes per input block, rounded to the sublane
    # packing, capped so that large inputs produce >= ~4 grid steps (v7x has
    # two TensorCores sharded along the "parallel" grid axis).
    block_rows = max(sub_m,
                     (target_block_bytes // (lanes * itemsize)) // sub_m * sub_m)
    if rows > sub_m:
        block_rows = min(block_rows, _round_up(pl.cdiv(rows, 4), sub_m))
    block_rows = min(block_rows, _round_up(rows, sub_m))
    if rows < sub_m:
        block_rows = rows                        # block == full dim (allowed)

    grid = (pl.cdiv(rows, block_rows),)

    kernel = functools.partial(
        _varifocal_kernel, alpha=float(alpha), gamma=float(gamma),
        iou_weighted=bool(iou_weighted))

    cost = pl.CostEstimate(
        flops=15 * total,
        transcendentals=3 * total,
        bytes_accessed=3 * total * itemsize)

    out2 = pl.pallas_call(
        kernel,
        out_shape=jax.ShapeDtypeStruct((rows, lanes), dtype),
        grid_spec=pltpu.PrefetchScalarGridSpec(
            num_scalar_prefetch=0,
            grid=grid,
            in_specs=[
                pl.BlockSpec((block_rows, lanes), lambda i: (i, 0)),
                pl.BlockSpec((block_rows, lanes), lambda i: (i, 0)),
            ],
            out_specs=pl.BlockSpec((block_rows, lanes), lambda i: (i, 0)),
        ),
        compiler_params=pltpu.CompilerParams(
            dimension_semantics=("parallel",)),
        cost_estimate=cost,
    )(x2, t2)

    return out2.reshape(orig_shape)


class VarifocalLoss:
    """JAX/Pallas counterpart of the PyTorch VarifocalLoss module."""

    def __init__(self, alpha=0.75, gamma=2.0, iou_weighted=True):
        assert alpha >= 0.0
        self.alpha = alpha
        self.gamma = gamma
        self.iou_weighted = iou_weighted

    def __call__(self, pred, target):
        return varifocal_loss(pred, target, alpha=self.alpha,
                              gamma=self.gamma, iou_weighted=self.iou_weighted)


# ---------------------------------------------------------------------------
# Reference (pure JAX, mirrors the PyTorch module) + self-test
# ---------------------------------------------------------------------------
def _reference(pred, target, alpha=0.75, gamma=2.0, iou_weighted=True):
    pred = pred.astype(jnp.float32)
    target = target.astype(jnp.float32)
    ps = jax.nn.sigmoid(pred)
    pos = (target > 0.0).astype(jnp.float32)
    neg = (target <= 0.0).astype(jnp.float32)
    if iou_weighted:
        fw = target * pos + alpha * jnp.abs(ps - target) ** gamma * neg
    else:
        fw = pos + alpha * jnp.abs(ps - target) ** gamma * neg
    bce = jnp.maximum(pred, 0.0) - pred * target + jnp.log1p(jnp.exp(-jnp.abs(pred)))
    return bce * fw


def _make_inputs(key, shape, dtype=jnp.float32):
    k1, k2, k3 = jax.random.split(key, 3)
    pred = jax.random.normal(k1, shape, dtype=jnp.float32).astype(dtype)
    raw_t = jax.random.uniform(k2, shape, dtype=jnp.float32)
    pos_sel = jax.random.bernoulli(k3, p=0.25, shape=shape)
    target = jnp.where(pos_sel, raw_t, 0.0).astype(dtype)
    return pred, target


if __name__ == "__main__":
    key = jax.random.PRNGKey(0)

    # Small test configs exercising: the module's (N, C) contract, the
    # lane-dense multi-step-grid path, partial last blocks, and the
    # non-128-divisible fallback path.
    configs = [
        ((16, 32), True),     # demo shape: total % 512 == 0 -> (1, 512) slab
        ((256, 128), True),   # lane-dense slab, >= 4 grid steps
        ((40, 80), True),     # lane-dense slab with a partial last row block
        ((17, 33), False),    # fallback (rows, C) layout, iou_weighted=False
    ]

    outs = []
    for i, (shape, iou_w) in enumerate(configs):
        key, sub = jax.random.split(key)
        pred, target = _make_inputs(sub, shape)
        loss_fn = VarifocalLoss(alpha=0.75, gamma=2.0, iou_weighted=iou_w)
        out = jax.block_until_ready(loss_fn(pred, target))
        ref = _reference(pred, target, alpha=0.75, gamma=2.0, iou_weighted=iou_w)
        assert out.shape == shape
        assert jnp.allclose(out.astype(jnp.float32), ref, atol=1e-4, rtol=1e-4), \
            f"mismatch vs reference for config {i} {shape}"
        outs.append(out)

    jax.block_until_ready(outs)
    print("KERNEL_OK")
</pallas_src>

<mosaic_0001>
module attributes {stable_mosaic.version = 11 : i64} {
  func.func @_varifocal_kernel(%arg0: i32, %arg1: memref<1x512xf32, #tpu.memory_space<vmem>>, %arg2: memref<1x512xf32, #tpu.memory_space<vmem>>, %arg3: memref<1x512xf32, #tpu.memory_space<vmem>>) attributes {dimension_semantics = [#tpu.dimension_semantics<parallel>], iteration_bounds = array<i64: 1>, scalar_prefetch = 0 : i64, scratch_operands = 0 : i64, tpu.core_type = #tpu.core_type<tc>, window_params = [{transform_indices = @transform_0, window_bounds = array<i64: 1, 512>}, {transform_indices = @transform_1, window_bounds = array<i64: 1, 512>}, {transform_indices = @transform_2, window_bounds = array<i64: 1, 512>}]} {
    %c0 = arith.constant 0 : index
    %c0_0 = arith.constant 0 : index
    %0 = vector.load %arg1[%c0, %c0_0] : memref<1x512xf32, #tpu.memory_space<vmem>>, vector<1x512xf32>
    %c0_1 = arith.constant 0 : index
    %c0_2 = arith.constant 0 : index
    %1 = vector.load %arg2[%c0_1, %c0_2] : memref<1x512xf32, #tpu.memory_space<vmem>>, vector<1x512xf32>
    %2 = math.absf %0 : vector<1x512xf32>
    %cst = arith.constant 0.000000e+00 : f32
    %3 = vector.broadcast %cst : f32 to vector<1x512xf32>
    %4 = arith.subf %3, %2 : vector<1x512xf32>
    %5 = math.exp %4 : vector<1x512xf32>
    %6 = math.log1p %5 : vector<1x512xf32>
    %cst_3 = arith.constant 0.000000e+00 : f32
    %7 = vector.broadcast %cst_3 : f32 to vector<1x512xf32>
    %8 = arith.subf %7, %6 : vector<1x512xf32>
    %9 = math.exp %8 : vector<1x512xf32>
    %cst_4 = arith.constant 0.000000e+00 : f32
    %10 = vector.broadcast %cst_4 : f32 to vector<1x512xf32>
    %11 = arith.cmpf oge, %0, %10 : vector<1x512xf32>
    %12 = arith.mulf %5, %9 : vector<1x512xf32>
    %13 = arith.select %11, %9, %12 : vector<1x512xi1>, vector<1x512xf32>
    %14 = arith.subf %13, %1 : vector<1x512xf32>
    %15 = arith.mulf %14, %14 : vector<1x512xf32>
    %cst_5 = arith.constant 7.500000e-01 : f32
    %16 = vector.broadcast %cst_5 : f32 to vector<1x512xf32>
    %17 = arith.mulf %16, %15 : vector<1x512xf32>
    %cst_6 = arith.constant 0.000000e+00 : f32
    %18 = vector.broadcast %cst_6 : f32 to vector<1x512xf32>
    %19 = arith.cmpf ogt, %1, %18 : vector<1x512xf32>
    %20 = arith.select %19, %1, %17 : vector<1x512xi1>, vector<1x512xf32>
    %cst_7 = arith.constant 0.000000e+00 : f32
    %21 = vector.broadcast %cst_7 : f32 to vector<1x512xf32>
    %22 = arith.maximumf %0, %21 : vector<1x512xf32>
    %23 = arith.mulf %0, %1 : vector<1x512xf32>
    %24 = arith.subf %22, %23 : vector<1x512xf32>
    %25 = arith.addf %24, %6 : vector<1x512xf32>
    %26 = arith.mulf %25, %20 : vector<1x512xf32>
    %c0_8 = arith.constant 0 : index
    %c0_9 = arith.constant 0 : index
    %27 = vector.load %arg3[%c0_8, %c0_9] : memref<1x512xf32, #tpu.memory_space<vmem>>, vector<1x512xf32>
    tpu.vector_store %arg3[%c0_8, %c0_9], %26 {strides = array<i32>} : memref<1x512xf32, #tpu.memory_space<vmem>>, vector<1x512xf32>,
    return
  }
  func.func @transform_0(%arg0: i32) -> (i32, i32) {
    %c0_i32 = arith.constant 0 : i32
    %c0_i32_0 = arith.constant 0 : i32
    return %arg0, %c0_i32 : i32, i32
  }
  func.func @transform_1(%arg0: i32) -> (i32, i32) {
    %c0_i32 = arith.constant 0 : i32
    %c0_i32_0 = arith.constant 0 : i32
    return %arg0, %c0_i32 : i32, i32
  }
  func.func @transform_2(%arg0: i32) -> (i32, i32) {
    %c0_i32 = arith.constant 0 : i32
    %c0_i32_0 = arith.constant 0 : i32
    return %arg0, %c0_i32 : i32, i32
  }
}

</mosaic_0001>

<llo_original>
// kernel: tpu_custom_call.1
$region0: #{tpu_custom_call.1}
  #allocation0 [shape = 'u32[]', space=smem, size = 0x4, offset = 0x4, fixed_abs, tag = 'smem constant byte address 0x4 - core index']
  #allocation1 [shape = 'u32[144,128]{1,0:T(1,128)}', space=vmem, size = 0x12000, scoped, tag = 'internal scratch']
  %s0 = inlined_call_operand.hbm [shape: f32[1,512], index: 0, kind: input, shape index: {}]
  %s1 = inlined_call_operand.hbm [shape: f32[1,512], index: 1, kind: input, shape index: {}]
  %s2 = inlined_call_operand.hbm [shape: f32[1,512], index: 2, kind: output, shape index: {}]
  %s3 = sld [smem:[#allocation0]]
  $region26: #{tpu_custom_call.1} parent=0
    _
  %s5 = ssub.s32 1, %s3
  %s6 = scalar_select 0, %s5, %s3
  $region1: #{tpu_custom_call.1} parent=0
    #allocation2 [shape = 'u8[2048]{0}', space=vmem, size = 0x800, scoped, tag = 'input window, operand 0, single buffered']
    #allocation3 [shape = 's32[1]{0}', space=sflag, size = 0x4, scoped, tag = 'scoped memory for tpu_custom_call.1']
    #allocation4 [shape = 's32[1]{0}', space=sflag, size = 0x4, scoped, tag = 'scoped memory for tpu_custom_call.1']
    #allocation5 [shape = 'u8[2048]{0}', space=vmem, size = 0x800, scoped, tag = 'input window, operand 1, single buffered']
    #allocation6 [shape = 's32[1]{0}', space=sflag, size = 0x4, scoped, tag = 'scoped memory for tpu_custom_call.1']
    #allocation7 [shape = 'u8[2048]{0}', space=vmem, size = 0x800, scoped, tag = 'output window, operand 0, single buffered']
    %7 = vsyncpa [#allocation3], 0
    %8 = vsyncpa [#allocation6], 0
    %9 = vsyncpa [#allocation4], 0
    // Predicated region
    $region2: #{tpu_custom_call.1} parent=1 // pred_check
      _
    $region3: #{tpu_custom_call.1} parent=1 // pred_check_branch
      %11 = sbr.rel (0) target = $region5
    $region4: #{tpu_custom_call.1} parent=1 // pred_region
      %s13 = ssub.s32 64, 64
      %14 = vsyncadd [#allocation3], %s13
      %s16 = sshll.u32 [#allocation2], 4
      %s17 = int_to_ptr.vmem [resolvable:$true] %s16
      %19 = dma.hbm_to_vmem [thread:$0]  %s0, 64, %s17, [#allocation3]
    $region5: #{tpu_custom_call.1} parent=1 // pred_fallthru
      _
    // Predicated region
    $region6: #{tpu_custom_call.1} parent=1 // pred_check
      _
    $region7: #{tpu_custom_call.1} parent=1 // pred_check_branch
      %21 = sbr.rel (0) target = $region9
    $region8: #{tpu_custom_call.1} parent=1 // pred_region
      %s23 = ssub.s32 64, 64
      %24 = vsyncadd [#allocation6], %s23
      %s26 = sshll.u32 [#allocation5], 4
      %s27 = int_to_ptr.vmem [resolvable:$true] %s26
      %29 = dma.hbm_to_vmem [thread:$0]  %s1, 64, %s27, [#allocation6]
    $region9: #{tpu_custom_call.1} parent=1 // pred_fallthru
      _
    // Predicated region
    $region10: #{tpu_custom_call.1} parent=1 // pred_check
      _
    $region11: #{tpu_custom_call.1} parent=1 // pred_check_branch
      %31 = sbr.rel (0) target = $region13
    $region12: #{tpu_custom_call.1} parent=1 // pred_region
      %32 = dma.done [#allocation3], 64
    $region13: #{tpu_custom_call.1} parent=1 // pred_fallthru
      _
    // Predicated region
    $region14: #{tpu_custom_call.1} parent=1 // pred_check
      _
    $region15: #{tpu_custom_call.1} parent=1 // pred_check_branch
      %34 = sbr.rel (0) target = $region17
    $region16: #{tpu_custom_call.1} parent=1 // pred_region
      %35 = dma.done [#allocation6], 64
    $region17: #{tpu_custom_call.1} parent=1 // pred_fallthru
      _
    %v36 = vld [vmem:[#allocation2] sm:$0xf]
    %v37 = vld [vmem:[#allocation5] sm:$0xf]
    %v38 = vand.u32 2147483647, %v36
    %v39 = vsub.f32 0.0, %v38
    %v40 = vmul.f32 %v39, 1.442695
    %v41 = vpow.pop %v40
    %v42 = vadd.f32 %v41, 1.0
    %v43 = vlog2.pop %v42
    %v44 = vmul.f32 %v43, 0.6931472
    %v45 = vmul.f32 -0.5, %v41
    %v46 = vadd.f32 %v45, 1.0
    %v47 = vmul.f32 %v46, %v41
    %v48 = vand.u32 2147483647, %v41
    %vm49 = vcmp.lt.f32.partialorder %v48, 0.0004427343
    %v50 = vsel %vm49, %v47, %v44
    %v51 = vsub.f32 0.0, %v50
    %v52 = vmul.f32 %v51, 1.442695
    %v53 = vpow.pop %v52
    %vm54 = vcmp.ge.f32.partialorder %v36, 0.0
    %v55 = vmul.f32 %v41, %v53
    %v56 = vsel %vm54, %v53, %v55
    %v57 = vsub.f32 %v56, %v37
    %v58 = vmul.f32 %v57, %v57
    %v59 = vmul.f32 %v58, 0.75
    %vm60 = vcmp.gt.f32.partialorder %v37, 0.0
    %v61 = vsel %vm60, %v37, %v59
    %v62 = vmax.f32 %v36, 0.0
    %v63 = vmul.f32 %v36, %v37
    %v64 = vsub.f32 %v62, %v63
    %v65 = vadd.f32 %v64, %v50
    %v66 = vmul.f32 %v65, %v61
    %v67 = vlaneseq
    %vm68 = vcmp.ge.s32.totalorder %v67, 0
    %vm69 = vcmp.lt.s32.totalorder %v67, 512
    %vm70 = vmand %vm68, %vm69
    %71 = vst.msk [vmem:[#allocation7] sm:$0xf] %vm70, %v66
    // Predicated region
    $region18: #{tpu_custom_call.1} parent=1 // pred_check
      _
    $region19: #{tpu_custom_call.1} parent=1 // pred_check_branch
      %73 = sbr.rel (0) target = $region21
    $region20: #{tpu_custom_call.1} parent=1 // pred_region
      %s75 = ssub.s32 64, 64
      %76 = vsyncadd [#allocation4], %s75
      %s78 = sshll.u32 [#allocation7], 4
      %s79 = int_to_ptr.vmem [resolvable:$true] %s78
      %81 = dma.vmem_to_hbm [thread:$0]  %s79, 64, %s2, [#allocation4]
    $region21: #{tpu_custom_call.1} parent=1 // pred_fallthru
      _
    // Predicated region
    $region22: #{tpu_custom_call.1} parent=1 // pred_check
      _
    $region23: #{tpu_custom_call.1} parent=1 // pred_check_branch
      %83 = sbr.rel (0) target = $region25
    $region24: #{tpu_custom_call.1} parent=1 // pred_region
      %84 = dma.done [#allocation4], 64
    $region25: #{tpu_custom_call.1} parent=1 // pred_fallthru
      _
    %85 = vsyncpa [#allocation3], 1
    %86 = vsyncpa [#allocation6], 1
    %87 = vsyncpa [#allocation4], 1

</llo_original>
